<compile_context>
chip_gen: v7x
topology: tpu7x:2x2x1
jax: 0.10.0
libtpu: 0.0.40
codegen_flags: <defaults>
</compile_context>

<pallas_src>
import jax
import jax.numpy as jnp
from jax.experimental import pallas as pl
from jax.experimental.pallas import tpu as pltpu

_LANE = 128


def _normalize_kernel(scale_ref, bias_ref, img_ref, out_ref):
    # scale_ref, bias_ref: VMEM tiles (ROWS, 1) f32  (per-row channel affine)
    # img_ref            : VMEM tile  (ROWS, COLS) in the input dtype
    # out_ref            : VMEM tile  (ROWS, COLS) in the output dtype
    x = img_ref[...].astype(jnp.float32)
    out_ref[...] = (x * scale_ref[...] + bias_ref[...]).astype(out_ref.dtype)


def _round_up(x, m):
    return ((x + m - 1) // m) * m


def _target_out_tile_bytes():
    """Per-buffer output tile budget, tuned per TPU generation."""
    try:
        kind = jax.devices()[0].device_kind.lower()
    except Exception:
        kind = ""
    if "v5" in kind:
        # v5e: ~820 GB/s HBM -> a 2 MiB step is ~5 us, per-step overhead <10%;
        # bigger tiles buy nothing and pressure the 16 MiB default scoped VMEM.
        return 2 << 20
    # v6e / v7x: faster HBM makes each step shorter, so use larger tiles to
    # keep the ~0.35 us grid-step overhead negligible.
    return 4 << 20


def normalize_forward(sample_dict, mean, std, out_dtype=jnp.float32):
    """JAX/Pallas equivalent of Normalize.forward.

    sample_dict: {'image': [N, C, H, W] (float or uint8 pixel values in [0,255]),
                  'label': any array}
    mean, std  : f32[C]
    out_dtype  : output dtype (jnp.float32 default; jnp.bfloat16 halves store
                 traffic on this HBM-bound kernel if consumers accept it)
    returns    : {'image': normalized [N, C, H, W] in out_dtype, 'label': unchanged}
    """
    image = sample_dict["image"]
    label = sample_dict["label"]
    N, C, H, W = image.shape
    NC, HW = N * C, H * W

    mean = jnp.asarray(mean, jnp.float32)
    std = jnp.asarray(std, jnp.float32)

    # Fused affine:  (img/255 - mean) / std  ==  img * scale + bias
    scale = 1.0 / (255.0 * std)              # (C,)
    bias = -mean / std                       # (C,)
    scale_col = jnp.tile(scale, N)[:, None]  # (N*C, 1), row r -> channel r % C
    bias_col = jnp.tile(bias, N)[:, None]    # (N*C, 1)

    # Lane-dense 2D view; reshape of a contiguous NCHW array is free.
    img2d = image.reshape(NC, HW)

    # --- block selection (cdiv tiling, generation-tuned caps) ---------------
    in_itemsize = jnp.dtype(image.dtype).itemsize
    out_itemsize = jnp.dtype(out_dtype).itemsize
    sub_mult = {1: 32, 2: 16}.get(in_itemsize, 8)    # sublane tiling of input dtype

    target_bytes = _target_out_tile_bytes()

    # Column block: multiple of 128 lanes, capped at 4096; Pallas masks the
    # ragged edge, interior stores stay unmasked `vst`.
    col_block = min(_round_up(HW, _LANE), 4096)

    # Row block: keep the output tile within the per-buffer budget; multiple of
    # the sublane tiling for the input dtype.
    per_elem = max(in_itemsize, out_itemsize)
    rows_cap = max(sub_mult, ((target_bytes // (col_block * per_elem)) // sub_mult) * sub_mult)
    row_block = min(_round_up(NC, sub_mult), rows_cap)

    grid = (pl.cdiv(NC, row_block), pl.cdiv(HW, col_block))  # columns innermost

    # Explicit VMEM budget: double-buffered in+out tiles plus the tiny
    # (rows,1) scale/bias columns (lane-padded to 128) plus margin.
    in_tile_b = row_block * col_block * in_itemsize
    out_tile_b = row_block * col_block * out_itemsize
    sb_tile_b = row_block * _LANE * 4
    needed = 2 * (in_tile_b + out_tile_b) + 4 * sb_tile_b + (4 << 20)
    vmem_limit = int(min(48 << 20, max(needed, 16 << 20)))
    # -------------------------------------------------------------------------

    out2d = pl.pallas_call(
        _normalize_kernel,
        out_shape=jax.ShapeDtypeStruct((NC, HW), out_dtype),
        grid=grid,
        in_specs=[
            pl.BlockSpec((row_block, 1), lambda i, j: (i, 0)),          # scale
            pl.BlockSpec((row_block, 1), lambda i, j: (i, 0)),          # bias
            pl.BlockSpec((row_block, col_block), lambda i, j: (i, j)),  # image
        ],
        out_specs=pl.BlockSpec((row_block, col_block), lambda i, j: (i, j)),
        compiler_params=pltpu.CompilerParams(
            dimension_semantics=("parallel", "parallel"),
            vmem_limit_bytes=vmem_limit,
        ),
    )(scale_col, bias_col, img2d)

    # label is passed through untouched, exactly as in the PyTorch module.
    return {"image": out2d.reshape(N, C, H, W), "label": label}


class Normalize:
    """Mirror of the PyTorch module (classNum is unused in forward)."""

    def __init__(self, classNum, mean=None, std=None, out_dtype=jnp.float32):
        self.classNum = classNum
        self.mean = jnp.array([0.0, 0.0, 0.0], jnp.float32) if mean is None else mean
        self.std = jnp.array([1.0, 1.0, 1.0], jnp.float32) if std is None else std
        self.out_dtype = out_dtype

    def __call__(self, sample_dict):
        return normalize_forward(sample_dict, self.mean, self.std, self.out_dtype)


if __name__ == "__main__":
    key = jax.random.PRNGKey(0)
    k_img, k_lbl, k_img2 = jax.random.split(key, 3)

    # Deterministic, non-trivial mean/std (ImageNet stats).
    mean = jnp.array([0.485, 0.456, 0.406], jnp.float32)
    std = jnp.array([0.229, 0.224, 0.225], jnp.float32)

    # --- test 1: small f32 image, H*W a multiple of 128 ---------------------
    N, C, H, W = 2, 3, 16, 16
    class_num = 4
    image = jax.random.uniform(k_img, (N, C, H, W), jnp.float32, 0.0, 255.0)
    label = jax.random.randint(k_lbl, (N, H, W), 0, class_num).astype(jnp.int32)

    module = Normalize(class_num, mean=mean, std=std)
    out = module({"image": image, "label": label})
    jax.block_until_ready(out["image"])
    jax.block_until_ready(out["label"])

    ref = (image / 255.0 - mean[None, :, None, None]) / std[None, :, None, None]
    assert out["image"].dtype == jnp.float32
    assert jnp.allclose(out["image"], ref, atol=1e-5, rtol=1e-5)
    assert (out["label"] == label).all()

    # --- test 2: uint8 pixels, ragged H*W (exercises cdiv edge masking) -----
    N2, H2, W2 = 1, 20, 20
    image_u8 = jax.random.randint(k_img2, (N2, C, H2, W2), 0, 256).astype(jnp.uint8)
    label2 = jnp.zeros((N2, H2, W2), jnp.int32)

    out2 = module({"image": image_u8, "label": label2})
    jax.block_until_ready(out2["image"])

    ref2 = (image_u8.astype(jnp.float32) / 255.0
            - mean[None, :, None, None]) / std[None, :, None, None]
    assert jnp.allclose(out2["image"], ref2, atol=1e-5, rtol=1e-5)
    assert (out2["label"] == label2).all()

    print("KERNEL_OK")
</pallas_src>

<mosaic_0001>
module attributes {stable_mosaic.version = 11 : i64} {
  func.func @_normalize_kernel(%arg0: i32, %arg1: i32, %arg2: memref<8x1xf32, #tpu.memory_space<vmem>>, %arg3: memref<8x1xf32, #tpu.memory_space<vmem>>, %arg4: memref<8x256xf32, #tpu.memory_space<vmem>>, %arg5: memref<8x256xf32, #tpu.memory_space<vmem>>) attributes {dimension_semantics = [#tpu.dimension_semantics<parallel>, #tpu.dimension_semantics<parallel>], iteration_bounds = array<i64: 1, 1>, scalar_prefetch = 0 : i64, scratch_operands = 0 : i64, tpu.core_type = #tpu.core_type<tc>, window_params = [{transform_indices = @transform_0, window_bounds = array<i64: 8, 1>}, {transform_indices = @transform_1, window_bounds = array<i64: 8, 1>}, {transform_indices = @transform_2, window_bounds = array<i64: 8, 256>}, {transform_indices = @transform_3, window_bounds = array<i64: 8, 256>}]} {
    %c0 = arith.constant 0 : index
    %c0_0 = arith.constant 0 : index
    %0 = vector.load %arg4[%c0, %c0_0] : memref<8x256xf32, #tpu.memory_space<vmem>>, vector<8x256xf32>
    %c0_1 = arith.constant 0 : index
    %c0_2 = arith.constant 0 : index
    %1 = vector.load %arg2[%c0_1, %c0_2] : memref<8x1xf32, #tpu.memory_space<vmem>>, vector<8x1xf32>
    %2 = vector.broadcast %1 : vector<8x1xf32> to vector<8x256xf32>
    %3 = arith.mulf %0, %2 : vector<8x256xf32>
    %c0_3 = arith.constant 0 : index
    %c0_4 = arith.constant 0 : index
    %4 = vector.load %arg3[%c0_3, %c0_4] : memref<8x1xf32, #tpu.memory_space<vmem>>, vector<8x1xf32>
    %5 = vector.broadcast %4 : vector<8x1xf32> to vector<8x256xf32>
    %6 = arith.addf %3, %5 : vector<8x256xf32>
    %c0_5 = arith.constant 0 : index
    %c0_6 = arith.constant 0 : index
    %7 = vector.load %arg5[%c0_5, %c0_6] : memref<8x256xf32, #tpu.memory_space<vmem>>, vector<8x256xf32>
    tpu.vector_store %arg5[%c0_5, %c0_6], %6 {strides = array<i32>} : memref<8x256xf32, #tpu.memory_space<vmem>>, vector<8x256xf32>,
    return
  }
  func.func @transform_0(%arg0: i32, %arg1: i32) -> (i32, i32) {
    %c0_i32 = arith.constant 0 : i32
    %c0_i32_0 = arith.constant 0 : i32
    return %arg0, %c0_i32 : i32, i32
  }
  func.func @transform_1(%arg0: i32, %arg1: i32) -> (i32, i32) {
    %c0_i32 = arith.constant 0 : i32
    %c0_i32_0 = arith.constant 0 : i32
    return %arg0, %c0_i32 : i32, i32
  }
  func.func @transform_2(%arg0: i32, %arg1: i32) -> (i32, i32) {
    %c0_i32 = arith.constant 0 : i32
    return %arg0, %arg1 : i32, i32
  }
  func.func @transform_3(%arg0: i32, %arg1: i32) -> (i32, i32) {
    %c0_i32 = arith.constant 0 : i32
    return %arg0, %arg1 : i32, i32
  }
}

</mosaic_0001>

<llo_original>
// kernel: tpu_custom_call.1
$region0: #{tpu_custom_call.1}
  #allocation0 [shape = 'u32[]', space=smem, size = 0x4, offset = 0x4, fixed_abs, tag = 'smem constant byte address 0x4 - core index']
  #allocation1 [shape = 'u32[144,128]{1,0:T(1,128)}', space=vmem, size = 0x12000, scoped, tag = 'internal scratch']
  %s0 = inlined_call_operand.vmem [shape: f32[6,1], index: 0, kind: input, shape index: {}]
  %s1 = inlined_call_operand.vmem [shape: f32[6,1], index: 1, kind: input, shape index: {}]
  %s2 = inlined_call_operand.vmem [shape: f32[6,256], index: 2, kind: input, shape index: {}]
  %s3 = inlined_call_operand.hbm [shape: f32[6,256], index: 3, kind: output, shape index: {}]
  %s4 = sld [smem:[#allocation0]]
  $region22: #{tpu_custom_call.1} parent=0
    _
  %s6 = ssub.s32 1, %s4
  %s7 = scalar_select 0, %s6, %s4
  $region1: #{tpu_custom_call.1} parent=0
    #allocation2 [shape = 'u8[8192]{0}', space=vmem, size = 0x2000, scoped, tag = 'output window, operand 0, single buffered']
    #allocation3 [shape = 's32[1]{0}', space=sflag, size = 0x4, scoped, tag = 'scoped memory for tpu_custom_call.1']
    %8 = vsyncpa [#allocation3], 0
    // Predicated region
    $region2: #{tpu_custom_call.1} parent=1 // pred_check
      _
    $region3: #{tpu_custom_call.1} parent=1 // pred_check_branch
      %10 = sbr.rel (0) target = $region5
    $region4: #{tpu_custom_call.1} parent=1 // pred_region
      _
    $region5: #{tpu_custom_call.1} parent=1 // pred_fallthru
      _
    // Predicated region
    $region6: #{tpu_custom_call.1} parent=1 // pred_check
      _
    $region7: #{tpu_custom_call.1} parent=1 // pred_check_branch
      %12 = sbr.rel (0) target = $region9
    $region8: #{tpu_custom_call.1} parent=1 // pred_region
      _
    $region9: #{tpu_custom_call.1} parent=1 // pred_fallthru
      _
    // Predicated region
    $region10: #{tpu_custom_call.1} parent=1 // pred_check
      _
    $region11: #{tpu_custom_call.1} parent=1 // pred_check_branch
      %14 = sbr.rel (0) target = $region13
    $region12: #{tpu_custom_call.1} parent=1 // pred_region
      _
    $region13: #{tpu_custom_call.1} parent=1 // pred_fallthru
      _
    %v15 = vld [vmem:[%s2] sm:$0xff]
    %v16 = vld [vmem:[%s2 + $0x8] sm:$0xff]
    %v17 = vld [vmem:[%s0] sm:$0xff]
    %19 = vset.pattern.permute.xlu0 0
    %20 = vperm.xlu0 %19, %v17
    %v21 = vpop.permute.xlu0 %20
    %v23 = vmul.f32 %v15, %v21
    %v24 = vmul.f32 %v16, %v21
    %v25 = vld [vmem:[%s1] sm:$0xff]
    %27 = vset.pattern.permute.xlu0 0
    %28 = vperm.xlu0 %27, %v25
    %v29 = vpop.permute.xlu0 %28
    %v31 = vadd.f32 %v23, %v29
    %v32 = vadd.f32 %v24, %v29
    %33 = vst [vmem:[#allocation2] sm:$0xff] %v31
    %34 = vst [vmem:[#allocation2 + $0x8] sm:$0xff] %v32
    // Predicated region
    $region14: #{tpu_custom_call.1} parent=1 // pred_check
      _
    $region15: #{tpu_custom_call.1} parent=1 // pred_check_branch
      %36 = sbr.rel (0) target = $region17
    $region16: #{tpu_custom_call.1} parent=1 // pred_region
      %s38 = ssub.s32 256, 256
      %39 = vsyncadd [#allocation3], %s38
      %s41 = sshll.u32 [#allocation2], 4
      %s42 = int_to_ptr.vmem [resolvable:$true] %s41
      %44 = dma.vmem_to_hbm [thread:$0]  %s42, 256, %s3, [#allocation3]
    $region17: #{tpu_custom_call.1} parent=1 // pred_fallthru
      _
    // Predicated region
    $region18: #{tpu_custom_call.1} parent=1 // pred_check
      _
    $region19: #{tpu_custom_call.1} parent=1 // pred_check_branch
      %46 = sbr.rel (0) target = $region21
    $region20: #{tpu_custom_call.1} parent=1 // pred_region
      %47 = dma.done [#allocation3], 256
    $region21: #{tpu_custom_call.1} parent=1 // pred_fallthru
      _
    %48 = vsyncpa [#allocation3], 1

</llo_original>
